<compile_context>
chip_gen: v6e
topology: v6e:2x2x1
jax: 0.10.0
libtpu: 0.0.40
codegen_flags: <defaults>
</compile_context>

<pallas_src>
import jax
import jax.numpy as jnp
from jax import lax
from jax.experimental import pallas as pl
from jax.experimental.pallas import tpu as pltpu

BN_EPS = 1e-5


def _round_up(x, m):
    return (x + m - 1) // m * m


# ------------------------------ Pallas kernel -------------------------------

def _matmul_bias_kernel(a_ref, w_ref, b_ref, o_ref):
    # One row tile of the fused conv: [TM, K] @ [K, Cout] + bias (f32 accum).
    acc = jnp.dot(a_ref[...], w_ref[...], preferred_element_type=jnp.float32)
    o_ref[...] = (acc + b_ref[...]).astype(o_ref.dtype)


def fused_matmul_bias(a, w, bias, *, tm=256, vmem_limit_bytes=32 * 1024 * 1024):
    """out = a @ w + bias, row-tiled.  a:[M,K] bf16, w:[K,N] bf16, bias:[N] f32."""
    M, K = a.shape
    Kw, N = w.shape
    assert K == Kw, (K, Kw)

    tm = max(8, min(tm, _round_up(M, 8)))
    m_pad = _round_up(M, tm)
    if m_pad != M:
        a = jnp.pad(a, ((0, m_pad - M), (0, 0)))
    grid = (m_pad // tm,)

    bias2 = bias.reshape(1, N).astype(jnp.float32)

    out = pl.pallas_call(
        _matmul_bias_kernel,
        grid=grid,
        in_specs=[
            pl.BlockSpec((tm, K), lambda i: (i, 0)),   # activation row tile
            pl.BlockSpec((K, N), lambda i: (0, 0)),    # combined weights (resident)
            pl.BlockSpec((1, N), lambda i: (0, 0)),    # combined bias (resident)
        ],
        out_specs=pl.BlockSpec((tm, N), lambda i: (i, 0)),
        out_shape=jax.ShapeDtypeStruct((m_pad, N), jnp.float32),
        compiler_params=pltpu.CompilerParams(
            dimension_semantics=("parallel",),
            vmem_limit_bytes=vmem_limit_bytes,
        ),
    )(a, w, bias2)
    return out[:M] if m_pad != M else out


# ------------------------------ module forward ------------------------------

def input_block_forward(x, params, *, tm=256):
    """PyTorch input_Block.forward (eval mode).  x: NCHW f32 -> NCHW f32."""
    N, Cin, H, W = x.shape
    w3 = params['conv']['w']        # (Cout, Cin, 3, 3)
    w1 = params['ident']['w']       # (Cout, Cin, 1, 1)
    Cout = w3.shape[0]

    # NCHW -> NHWC once, at the boundary.
    x_nhwc = jnp.transpose(x, (0, 2, 3, 1))

    # Eval-mode BatchNorm affine (running stats) + ReLU6, folded into the
    # im2col producer so it fuses with the pad/gather (no extra HBM pass).
    bn = params['bn']
    scale = bn['g'] / jnp.sqrt(bn['rv'] + BN_EPS)
    shift = bn['b'] - bn['rm'] * scale
    act = jnp.clip(x_nhwc * scale + shift, 0.0, 6.0)

    # conv2d zero-pads the *activated* tensor (matches the PyTorch op order).
    act_p = jnp.pad(act, ((0, 0), (1, 1), (1, 1), (0, 0)))

    # im2col: 9 shifted views -> [M, 9*Cin]; column order (ki, kj, cin).
    cols = [act_p[:, i:i + H, j:j + W, :] for i in range(3) for j in range(3)]
    patches = jnp.concatenate(cols, axis=-1).reshape(N * H * W, 9 * Cin)
    x_rows = x_nhwc.reshape(N * H * W, Cin)

    # Fuse both convs + residual add into a single MXU pass:
    #   [patches | x] @ [[W3_2d], [W1_2d]] + (b3 + b1)
    a_comb = jnp.concatenate([patches, x_rows], axis=-1).astype(jnp.bfloat16)
    w3_2d = jnp.transpose(w3, (2, 3, 1, 0)).reshape(9 * Cin, Cout)   # [(ki,kj,cin), Cout]
    w1_2d = jnp.transpose(w1.reshape(Cout, Cin), (1, 0))             # [Cin, Cout]
    w_comb = jnp.concatenate([w3_2d, w1_2d], axis=0).astype(jnp.bfloat16)
    bias = (params['conv']['b'] + params['ident']['b']).astype(jnp.float32)

    # NOTE: PyTorch evaluates conv2d(bnRelu6(input)) twice and keeps the second
    # result; both are bit-identical in eval mode, so it is computed once.
    # TODO(synk): training-mode BatchNorm batch statistics are not modelled.
    y = fused_matmul_bias(a_comb, w_comb, bias, tm=tm)               # [M, Cout] f32

    # NHWC -> NCHW once, at the boundary.  (Cout=32 < 128 lanes is fixed by the
    # module's output_channel, so the final store is partially masked.)
    return jnp.transpose(y.reshape(N, H, W, Cout), (0, 3, 1, 2))


# ------------------------------ reference path ------------------------------

def reference_forward(x, params):
    """Plain-JAX reference with the same bf16 operand rounding as the kernel."""
    bn = params['bn']
    scale = bn['g'] / jnp.sqrt(bn['rv'] + BN_EPS)
    shift = bn['b'] - bn['rm'] * scale
    act = jnp.clip(x * scale[None, :, None, None] + shift[None, :, None, None],
                   0.0, 6.0)
    act = act.astype(jnp.bfloat16).astype(jnp.float32)
    xq = x.astype(jnp.bfloat16).astype(jnp.float32)
    w3 = params['conv']['w'].astype(jnp.bfloat16).astype(jnp.float32)
    w1 = params['ident']['w'].astype(jnp.bfloat16).astype(jnp.float32)
    dn = ('NCHW', 'OIHW', 'NCHW')
    out = lax.conv_general_dilated(act, w3, (1, 1), ((1, 1), (1, 1)),
                                   dimension_numbers=dn,
                                   precision=lax.Precision.HIGHEST)
    out = out + params['conv']['b'][None, :, None, None]
    res = lax.conv_general_dilated(xq, w1, (1, 1), ((0, 0), (0, 0)),
                                   dimension_numbers=dn,
                                   precision=lax.Precision.HIGHEST)
    res = res + params['ident']['b'][None, :, None, None]
    return out + res


# ------------------------------ parameter init ------------------------------

def init_params(key, in_channel, out_channel):
    ks = jax.random.split(key, 6)

    def nrm(k, shape, s=0.1):
        return s * jax.random.normal(k, shape, dtype=jnp.float32)

    return {
        'bn': dict(g=1.0 + nrm(ks[0], (in_channel,)),
                   b=nrm(ks[1], (in_channel,)),
                   rm=jnp.zeros((in_channel,), jnp.float32),   # running_mean
                   rv=jnp.ones((in_channel,), jnp.float32)),   # running_var
        'conv': dict(w=nrm(ks[2], (out_channel, in_channel, 3, 3)),
                     b=nrm(ks[3], (out_channel,))),
        'ident': dict(w=nrm(ks[4], (out_channel, in_channel, 1, 1)),
                      b=nrm(ks[5], (out_channel,))),
    }


# ----------------------------------- main -----------------------------------

if __name__ == "__main__":
    key = jax.random.PRNGKey(0)
    k_params, k_x = jax.random.split(key)

    in_channel, out_channel = 4, 32
    params = init_params(k_params, in_channel, out_channel)
    x = jax.random.normal(k_x, (2, in_channel, 16, 16), dtype=jnp.float32)

    fwd = jax.jit(input_block_forward)
    out = fwd(x, params)
    jax.block_until_ready(out)
    assert out.shape == (2, out_channel, 16, 16), out.shape

    ref = reference_forward(x, params)
    err = float(jnp.max(jnp.abs(out - ref)))
    assert err < 2e-2, f"max |err| = {err}"

    print("KERNEL_OK")
</pallas_src>

<mosaic_0001>
module attributes {stable_mosaic.version = 11 : i64} {
  func.func @_matmul_bias_kernel(%arg0: i32, %arg1: memref<256x40xbf16, #tpu.memory_space<vmem>>, %arg2: memref<40x32xbf16, #tpu.memory_space<vmem>>, %arg3: memref<1x32xf32, #tpu.memory_space<vmem>>, %arg4: memref<256x32xf32, #tpu.memory_space<vmem>>) attributes {dimension_semantics = [#tpu.dimension_semantics<parallel>], iteration_bounds = array<i64: 2>, scalar_prefetch = 0 : i64, scratch_operands = 0 : i64, tpu.core_type = #tpu.core_type<tc>, window_params = [{transform_indices = @transform_0, window_bounds = array<i64: 256, 40>}, {pipeline_mode = #tpu.pipeline_mode<synchronous>, transform_indices = @transform_1, window_bounds = array<i64: 40, 32>}, {pipeline_mode = #tpu.pipeline_mode<synchronous>, transform_indices = @transform_2, window_bounds = array<i64: 1, 32>}, {transform_indices = @transform_3, window_bounds = array<i64: 256, 32>}]} {
    %c0 = arith.constant 0 : index
    %c0_0 = arith.constant 0 : index
    %0 = vector.load %arg1[%c0, %c0_0] : memref<256x40xbf16, #tpu.memory_space<vmem>>, vector<256x40xbf16>
    %c0_1 = arith.constant 0 : index
    %c0_2 = arith.constant 0 : index
    %1 = vector.load %arg2[%c0_1, %c0_2] : memref<40x32xbf16, #tpu.memory_space<vmem>>, vector<40x32xbf16>
    %cst = arith.constant dense<0.000000e+00> : vector<256x32xf32>
    %2 = tpu.matmul %0, %1, %cst {dimension_numbers = #tpu.dot_dimension_numbers<[1], [0], [0], [1], [0, 0, 1, 1], [], []>} : vector<256x40xbf16>, vector<40x32xbf16>, vector<256x32xf32> -> vector<256x32xf32>
    %c0_3 = arith.constant 0 : index
    %c0_4 = arith.constant 0 : index
    %3 = vector.load %arg3[%c0_3, %c0_4] : memref<1x32xf32, #tpu.memory_space<vmem>>, vector<1x32xf32>
    %4 = vector.broadcast %3 : vector<1x32xf32> to vector<256x32xf32>
    %5 = arith.addf %2, %4 : vector<256x32xf32>
    %c0_5 = arith.constant 0 : index
    %c0_6 = arith.constant 0 : index
    %6 = vector.load %arg4[%c0_5, %c0_6] : memref<256x32xf32, #tpu.memory_space<vmem>>, vector<256x32xf32>
    tpu.vector_store %arg4[%c0_5, %c0_6], %5 {strides = array<i32>} : memref<256x32xf32, #tpu.memory_space<vmem>>, vector<256x32xf32>,
    return
  }
  func.func @transform_0(%arg0: i32) -> (i32, i32) {
    %c0_i32 = arith.constant 0 : i32
    %c0_i32_0 = arith.constant 0 : i32
    return %arg0, %c0_i32 : i32, i32
  }
  func.func @transform_1(%arg0: i32) -> (i32, i32) {
    %c0_i32 = arith.constant 0 : i32
    %c0_i32_0 = arith.constant 0 : i32
    %c0_i32_1 = arith.constant 0 : i32
    return %c0_i32, %c0_i32_0 : i32, i32
  }
  func.func @transform_2(%arg0: i32) -> (i32, i32) {
    %c0_i32 = arith.constant 0 : i32
    %c0_i32_0 = arith.constant 0 : i32
    %c0_i32_1 = arith.constant 0 : i32
    return %c0_i32, %c0_i32_0 : i32, i32
  }
  func.func @transform_3(%arg0: i32) -> (i32, i32) {
    %c0_i32 = arith.constant 0 : i32
    %c0_i32_0 = arith.constant 0 : i32
    return %arg0, %c0_i32 : i32, i32
  }
}

</mosaic_0001>

<llo_original>
// kernel: input_block_forward.1
$region0: #{input_block_forward.1}
  #allocation0 [shape = 'u32[]', space=smem, size = 0x4, offset = 0x4, fixed_abs, tag = 'smem constant byte address 0x4 - core index']
  #allocation1 [shape = 'u32[144,128]{1,0:T(1,128)}', space=vmem, size = 0x12000, scoped, tag = 'internal scratch']
  %s0 = inlined_call_operand.vmem [shape: bf16[512,40], index: 0, kind: input, shape index: {}]
  %s1 = inlined_call_operand.vmem [shape: bf16[40,32], index: 1, kind: input, shape index: {}]
  %s2 = inlined_call_operand.vmem [shape: f32[1,32], index: 2, kind: input, shape index: {}]
  %s3 = inlined_call_operand.hbm [shape: f32[512,32], index: 3, kind: output, shape index: {}]
  %s4 = sld [smem:[#allocation0]]
  $region45: #{input_block_forward.1} parent=0
    _
  %s6 = ssub.s32 1, %s4
  %s7 = scalar_select 0, %s6, %s4
  $region1: #{input_block_forward.1} parent=0
    #allocation2 [shape = 'u8[262144]{0}', space=vmem, size = 0x40000, scoped, tag = 'output window, operand 0']
    #allocation3 [shape = 's32[2]{0}', space=sflag, size = 0x8, scoped, tag = 'scoped memory for input_block_forward.1']
    %8 = vsyncpa [#allocation3], 0
    %s9 = scalar_lea.sflag [#allocation3], 1
    %10 = vsyncpa %s9, 0
    loop: start=0, step=1, limit=4
    $region2: #{input_block_forward.1} parent=1 // loop_pre_header
      _
    $region3: #{input_block_forward.1} parent=1 // loop_header
      %s12 = sphi 0, %s16
      %p13 = scmp.ge.s32.totalorder %s12, 4
      %s22 = sphi 0, %s24
      %s25 = sphi 0, %s22
      %s26 = sphi 0, %s25
      %s42 = sphi 0, %s26
      %s46 = sphi 0, %s46
      %s48 = sphi 0, %s46
      %s49 = sphi 0, %s48
      %s63 = sphi 0, %s49
      %s67 = sphi 0, %s67
      %s69 = sphi 0, %s67
      %s70 = sphi 0, %s69
      %s84 = sphi 0, %s70
      %s90 = sphi 0, %s92
      %s93 = sphi 0, %s90
      %s94 = sphi 0, %s93
      %s110 = sphi 0, %s94
    $region4: #{input_block_forward.1} parent=1 // loop_header_branch
      %15 = sbr.rel (%p13) target = $region8
    $region5: #{input_block_forward.1} parent=1 // loop_body
      %s17 = ssub.s32 %s12, 1
      %s18 = ssub.s32 %s12, 2
      %s19 = sadd.s32 %s12, 1
      %s20 = ssub.s32 %s12, %s19
      %p21 = scmp.eq.s32.totalorder %s20, 0
      %s23 = sadd.s32 %s22, 1
      %s24 = scalar_select %p21, %s22, %s23
      %p27 = pneg %p21
      %p28 = scmp.eq.s32.totalorder %s12, 1
      %p29 = por %p27, %p28
      %p30 = scmp.ne.s32.totalorder %s22, %s25
      %p31 = scmp.eq.s32.totalorder %s12, 0
      %p32 = por %p30, %p31
      %p33 = scmp.ne.s32.totalorder %s22, %s25
      %p34 = scmp.eq.s32.totalorder %s17, 1
      %p35 = por %p33, %p34
      %p36 = scmp.ne.s32.totalorder %s25, %s26
      %p37 = scmp.eq.s32.totalorder %s17, 0
      %p38 = por %p36, %p37
      %p39 = scmp.ne.s32.totalorder %s25, %s26
      %p40 = scmp.eq.s32.totalorder %s18, 1
      %p41 = por %p39, %p40
      %p43 = scmp.ne.s32.totalorder %s26, %s42
      %p44 = scmp.eq.s32.totalorder %s18, 0
      %p45 = por %p43, %p44
      %s47 = sadd.s32 %s46, 1
      %p50 = scmp.eq.s32.totalorder %s12, 1
      %p51 = scmp.ne.s32.totalorder %s46, %s48
      %p52 = scmp.eq.s32.totalorder %s12, 0
      %p53 = por %p51, %p52
      %p54 = scmp.ne.s32.totalorder %s46, %s48
      %p55 = scmp.eq.s32.totalorder %s17, 1
      %p56 = por %p54, %p55
      %p57 = scmp.ne.s32.totalorder %s48, %s49
      %p58 = scmp.eq.s32.totalorder %s17, 0
      %p59 = por %p57, %p58
      %p60 = scmp.ne.s32.totalorder %s48, %s49
      %p61 = scmp.eq.s32.totalorder %s18, 1
      %p62 = por %p60, %p61
      %p64 = scmp.ne.s32.totalorder %s49, %s63
      %p65 = scmp.eq.s32.totalorder %s18, 0
      %p66 = por %p64, %p65
      %s68 = sadd.s32 %s67, 1
      %p71 = scmp.eq.s32.totalorder %s12, 1
      %p72 = scmp.ne.s32.totalorder %s67, %s69
      %p73 = scmp.eq.s32.totalorder %s12, 0
      %p74 = por %p72, %p73
      %p75 = scmp.ne.s32.totalorder %s67, %s69
      %p76 = scmp.eq.s32.totalorder %s17, 1
      %p77 = por %p75, %p76
      %p78 = scmp.ne.s32.totalorder %s69, %s70
      %p79 = scmp.eq.s32.totalorder %s17, 0
      %p80 = por %p78, %p79
      %p81 = scmp.ne.s32.totalorder %s69, %s70
      %p82 = scmp.eq.s32.totalorder %s18, 1
      %p83 = por %p81, %p82
      %p85 = scmp.ne.s32.totalorder %s70, %s84
      %p86 = scmp.eq.s32.totalorder %s18, 0
      %p87 = por %p85, %p86
      %s88 = ssub.s32 %s12, %s19
      %p89 = scmp.eq.s32.totalorder %s88, 0
      %s91 = sadd.s32 %s90, 1
      %s92 = scalar_select %p89, %s90, %s91
      %p95 = pneg %p89
      %p96 = scmp.eq.s32.totalorder %s12, 1
      %p97 = por %p95, %p96
      %p98 = scmp.ne.s32.totalorder %s90, %s93
      %p99 = scmp.eq.s32.totalorder %s12, 0
      %p100 = por %p98, %p99
      %p101 = scmp.ne.s32.totalorder %s90, %s93
      %p102 = scmp.eq.s32.totalorder %s17, 1
      %p103 = por %p101, %p102
      %p104 = scmp.ne.s32.totalorder %s93, %s94
      %p105 = scmp.eq.s32.totalorder %s17, 0
      %p106 = por %p104, %p105
      %p107 = scmp.ne.s32.totalorder %s93, %s94
      %p108 = scmp.eq.s32.totalorder %s18, 1
      %p109 = por %p107, %p108
      %p111 = scmp.ne.s32.totalorder %s94, %s110
      %p112 = scmp.eq.s32.totalorder %s18, 0
      %p113 = por %p111, %p112
      %p114 = scmp.le.s32.totalorder 1, %s12
      %p115 = scmp.lt.s32.totalorder %s12, 3
      %p116 = pnand %p114, %p115
      %p117 = pneg %p116
      // Predicated region
      $region9: #{input_block_forward.1} parent=5 // pred_check
        _
      $region10: #{input_block_forward.1} parent=5 // pred_check_branch
        %119 = sbr.rel (%p116) target = $region12
      $region11: #{input_block_forward.1} parent=5 // pred_region
        %s120 = ssub.s32 %s12, 1
        // Predicated region
        $region13: #{input_block_forward.1} parent=11 // pred_check
          %p121 = pneg %p59
        $region14: #{input_block_forward.1} parent=11 // pred_check_branch
          %123 = sbr.rel (%p121) target = $region16
        $region15: #{input_block_forward.1} parent=11 // pred_region
          _
        $region16: #{input_block_forward.1} parent=11 // pred_fallthru
          _
        // Predicated region
        $region17: #{input_block_forward.1} parent=11 // pred_check
          %p124 = pneg %p80
        $region18: #{input_block_forward.1} parent=11 // pred_check_branch
          %126 = sbr.rel (%p124) target = $region20
        $region19: #{input_block_forward.1} parent=11 // pred_region
          _
        $region20: #{input_block_forward.1} parent=11 // pred_fallthru
          _
      $region12: #{input_block_forward.1} parent=5 // pred_fallthru
        _
      %p127 = scmp.lt.s32.totalorder %s12, 2
      // Predicated region
      $region21: #{input_block_forward.1} parent=5 // pred_check
        %p128 = pneg %p127
      $region22: #{input_block_forward.1} parent=5 // pred_check_branch
        %130 = sbr.rel (%p128) target = $region24
      $region23: #{input_block_forward.1} parent=5 // pred_region
        // Predicated region
        $region25: #{input_block_forward.1} parent=23 // pred_check
          %p131 = pneg %p32
        $region26: #{input_block_forward.1} parent=23 // pred_check_branch
          %133 = sbr.rel (%p131) target = $region28
        $region27: #{input_block_forward.1} parent=23 // pred_region
          %s134 = smul.u32 32, %s12
          %p135 = scmp.lt.s32.totalorder %s134, 63
          %s136 = scalar_select %p135, %s134, 63
          %s137 = smul.addr %s136, 4
          %s138 = scalar_lea.vmem %s0, %s137
          %s139 = smul.u32 32, %s12
        $region28: #{input_block_forward.1} parent=23 // pred_fallthru
          _
      $region24: #{input_block_forward.1} parent=5 // pred_fallthru
        _
      %p140 = scmp.le.s32.totalorder 1, %s12
      %p141 = scmp.lt.s32.totalorder %s12, 3
      %p142 = pnand %p140, %p141
      %p143 = pneg %p142
      // Predicated region
      $region29: #{input_block_forward.1} parent=5 // pred_check
        _
      $region30: #{input_block_forward.1} parent=5 // pred_check_branch
        %145 = sbr.rel (%p142) target = $region32
      $region31: #{input_block_forward.1} parent=5 // pred_region
        %s146 = ssub.s32 %s12, 1
        %s147 = smul.u32 32, %s17
        %p148 = scmp.lt.s32.totalorder %s147, 63
        %s149 = scalar_select %p148, %s147, 63
        %s150 = smul.addr %s149, 4
        %s151 = scalar_lea.vmem %s0, %s150
        %p152 = pneg %p38
        %p153 = pneg %p35
        %p154 = pneg %p59
        %p155 = pneg %p56
        %p156 = pneg %p80
        %p157 = pneg %p77
        %p158 = pneg %p106
        %p159 = pneg %p103
        %s160 = sand.u32 %s93, 1
        %s161 = scalar_lea.sflag [#allocation3], %s160
        %s162 = sand.u32 %s93, 1
        %s163 = smul.addr %s162, 256
        %s164 = scalar_lea.vmem [#allocation2], %s163
        %s165 = smul.u32 32, %s17
        %p166 = scmp.lt.s32.totalorder %s165, 63
        %s167 = scalar_select %p166, %s165, 63
        %s168 = smul.addr %s167, 4
        %s169 = scalar_lea.vmem %s0, %s168
        %s170 = smul.u32 32, %s17
        %s171 = smul.u32 32, %s17
        %v173 = vld [vmem:[%s169] sm:$0xf]
        %v174 = vld [vmem:[%s169 + $0x4] sm:$0xf]
        %v175 = vld [vmem:[%s169 + $0x8] sm:$0xf]
        %v176 = vld [vmem:[%s169 + $0xc] sm:$0xf]
        %v177 = vld [vmem:[%s169 + $0x10] sm:$0xf]
        %v178 = vld [vmem:[%s169 + $0x14] sm:$0xf]
        %v179 = vld [vmem:[%s169 + $0x18] sm:$0xf]
        %v180 = vld [vmem:[%s169 + $0x1c] sm:$0xf]
        %v181 = vld [vmem:[%s169 + $0x20] sm:$0xf]
        %v182 = vld [vmem:[%s169 + $0x24] sm:$0xf]
        %v183 = vld [vmem:[%s169 + $0x28] sm:$0xf]
        %v184 = vld [vmem:[%s169 + $0x2c] sm:$0xf]
        %v185 = vld [vmem:[%s169 + $0x30] sm:$0xf]
        %v186 = vld [vmem:[%s169 + $0x34] sm:$0xf]
        %v187 = vld [vmem:[%s169 + $0x38] sm:$0xf]
        %v188 = vld [vmem:[%s169 + $0x3c] sm:$0xf]
        %v189 = vld [vmem:[%s169 + $0x40] sm:$0xf]
        %v190 = vld [vmem:[%s169 + $0x44] sm:$0xf]
        %v191 = vld [vmem:[%s169 + $0x48] sm:$0xf]
        %v192 = vld [vmem:[%s169 + $0x4c] sm:$0xf]
        %v193 = vld [vmem:[%s169 + $0x50] sm:$0xf]
        %v194 = vld [vmem:[%s169 + $0x54] sm:$0xf]
        %v195 = vld [vmem:[%s169 + $0x58] sm:$0xf]
        %v196 = vld [vmem:[%s169 + $0x5c] sm:$0xf]
        %v197 = vld [vmem:[%s169 + $0x60] sm:$0xf]
        %v198 = vld [vmem:[%s169 + $0x64] sm:$0xf]
        %v199 = vld [vmem:[%s169 + $0x68] sm:$0xf]
        %v200 = vld [vmem:[%s169 + $0x6c] sm:$0xf]
        %v201 = vld [vmem:[%s169 + $0x70] sm:$0xf]
        %v202 = vld [vmem:[%s169 + $0x74] sm:$0xf]
        %v203 = vld [vmem:[%s169 + $0x78] sm:$0xf]
        %v204 = vld [vmem:[%s169 + $0x7c] sm:$0xf]
        %v205 = vld [vmem:[%s1] sm:$0xf]
        %v206 = vld [vmem:[%s1 + $0x4] sm:$0xf]
        %v207 = vld [vmem:[%s1 + $0x8] sm:$0xf]
        %v208 = vld [vmem:[%s1 + $0xc] sm:$0xf]
        %v209 = vld [vmem:[%s1 + $0x10] sm:$0xf]
        %v210 = vld [vmem:[%s2] sm:$0x1]
        %v212 = vlaneseq
        %v213 = vshrl.u32 %v212, 7
        %v214 = vsub.s32 0, %v213
        %v215 = vrot.slane %v210, %v214
        %v249 = vunpack.c.l.b16 %v173
        %v250 = vunpack.c.l.b16 %v174
        %v251 = vunpack.c.l.b16 %v175
        %v252 = vunpack.c.l.b16 %v176
        %v253 = vunpack.c.l.b16 %v177
        %v254 = vunpack.c.l.b16 %v178
        %v255 = vunpack.c.l.b16 %v179
        %v256 = vunpack.c.l.b16 %v180
        %v257 = vunpack.c.l.b16 %v181
        %v258 = vunpack.c.l.b16 %v182
        %v259 = vunpack.c.l.b16 %v183
        %v260 = vunpack.c.l.b16 %v184
        %v261 = vunpack.c.l.b16 %v185
        %v262 = vunpack.c.l.b16 %v186
        %v263 = vunpack.c.l.b16 %v187
        %v264 = vunpack.c.l.b16 %v188
        %v265 = vunpack.c.l.b16 %v189
        %v266 = vunpack.c.l.b16 %v190
        %v267 = vunpack.c.l.b16 %v191
        %v268 = vunpack.c.l.b16 %v192
        %v269 = vunpack.c.l.b16 %v193
        %v270 = vunpack.c.l.b16 %v194
        %v271 = vunpack.c.l.b16 %v195
        %v272 = vunpack.c.l.b16 %v196
        %v273 = vunpack.c.l.b16 %v197
        %v274 = vunpack.c.l.b16 %v198
        %v275 = vunpack.c.l.b16 %v199
        %v276 = vunpack.c.l.b16 %v200
        %v277 = vunpack.c.l.b16 %v201
        %v278 = vunpack.c.l.b16 %v202
        %v279 = vunpack.c.l.b16 %v203
        %v280 = vunpack.c.l.b16 %v204
        %v281 = vpack.c.b16 %v250, %v249
        %v282 = vpack.c.b16 %v252, %v251
        %v283 = vpack.c.b16 %v254, %v253
        %v284 = vpack.c.b16 %v256, %v255
        %v285 = vpack.c.b16 %v258, %v257
        %v286 = vpack.c.b16 %v260, %v259
        %v287 = vpack.c.b16 %v262, %v261
        %v288 = vpack.c.b16 %v264, %v263
        %v289 = vpack.c.b16 %v266, %v265
        %v290 = vpack.c.b16 %v268, %v267
        %v291 = vpack.c.b16 %v270, %v269
        %v292 = vpack.c.b16 %v272, %v271
        %v293 = vpack.c.b16 %v274, %v273
        %v294 = vpack.c.b16 %v276, %v275
        %v295 = vpack.c.b16 %v278, %v277
        %v296 = vpack.c.b16 %v280, %v279
        %v302 = vunpack.c.l.b16 %v205
        %v303 = vunpack.c.l.b16 %v206
        %v304 = vunpack.c.l.b16 %v207
        %v305 = vunpack.c.l.b16 %v208
        %v306 = vunpack.c.l.b16 %v209
        %v307 = vpack.c.b16 %v303, %v302
        %v308 = vpack.c.b16 %v305, %v304
        %v309 = vpack.c.b16 %v306, %v306
        %vm312 = vcmask 326656
        %v314 = vsel %vm312, %v281, 0
        %v317 = vsel %vm312, %v282, 0
        %v320 = vsel %vm312, %v283, 0
        %v323 = vsel %vm312, %v284, 0
        %v326 = vsel %vm312, %v285, 0
        %v329 = vsel %vm312, %v286, 0
        %v332 = vsel %vm312, %v287, 0
        %v335 = vsel %vm312, %v288, 0
        %v338 = vsel %vm312, %v289, 0
        %v341 = vsel %vm312, %v290, 0
        %v344 = vsel %vm312, %v291, 0
        %v347 = vsel %vm312, %v292, 0
        %v350 = vsel %vm312, %v293, 0
        %v353 = vsel %vm312, %v294, 0
        %v356 = vsel %vm312, %v295, 0
        %v359 = vsel %vm312, %v296, 0
        %vm361 = vcmask 1043456
        %v363 = vsel %vm361, %v309, 0
        %365 = vmatprep.subr.bf16.mxu0 0
        %366 = vmatpush1.bf16.msra.mxu0 0
        %367 = vmatprep.subr.bf16.mxu0 0
        %368 = vmatpush1.bf16.msra.mxu0 0
        %369 = vmatprep.subr.bf16.mxu0 0
        %370 = vmatpush1.bf16.msra.mxu0 0
        %371 = vmatprep.subr.bf16.mxu0 0
        %372 = vmatpush1.bf16.msra.mxu0 0
        %373 = vmatprep.subr.bf16.mxu0 0
        %374 = vmatpush1.bf16.msra.mxu0 0
        %375 = vmatprep.subr.bf16.mxu0 0
        %376 = vmatpush1.bf16.msra.mxu0 %v363
        %377 = vmatprep.subr.bf16.mxu0 0
        %378 = vmatpush1.bf16.msra.mxu0 %v308
        %379 = vmatprep.subr.bf16.mxu0 0
        %380 = vmatpush1.bf16.msra.mxu0 %v307
        %381 = vmatprep.subr.bf16.mxu0 0
        %382 = vmatpush2.bf16.msra.mxu0 0
        %383 = vmatprep.subr.bf16.mxu0 0
        %384 = vmatpush2.bf16.msra.mxu0 0
        %385 = vmatprep.subr.bf16.mxu0 0
        %386 = vmatpush2.bf16.msra.mxu0 0
        %387 = vmatprep.subr.bf16.mxu0 0
        %388 = vmatpush2.bf16.msra.mxu0 0
        %389 = vmatprep.subr.bf16.mxu0 0
        %390 = vmatpush2.bf16.msra.mxu0 0
        %391 = vmatprep.subr.bf16.mxu0 0
        %392 = vmatpush2.bf16.msra.mxu0 0
        %393 = vmatprep.subr.bf16.mxu0 0
        %394 = vmatpush2.bf16.msra.mxu0 0
        %395 = vmatprep.subr.bf16.mxu0 0
        %396 = vmatpush2.bf16.msra.mxu0 0
        %397 = vmatprep.mubr.bf16.mxu0 0
        %398 = vmatmul.mubr.bf16.gmra.mxu0 %v314
        %v399 = vpop.f32.mrf.mxu0
        %v400 = vadd.f32 %v215, %v399
        %v401 = vpop.f32.mrf.mxu0
        %v402 = vpop.f32.mrf.mxu0
        %v403 = vadd.f32 %v215, %v402
        %v404 = vpop.f32.mrf.mxu0
        %405 = vmatprep.mubr.bf16.mxu0 0
        %406 = vmatmul.mubr.bf16.gmra.mxu0 %v317
        %v407 = vpop.f32.mrf.mxu0
        %v408 = vadd.f32 %v215, %v407
        %v409 = vpop.f32.mrf.mxu0
        %v410 = vpop.f32.mrf.mxu0
        %v411 = vadd.f32 %v215, %v410
        %v412 = vpop.f32.mrf.mxu0
        %413 = vmatprep.mubr.bf16.mxu0 0
        %414 = vmatmul.mubr.bf16.gmra.mxu0 %v320
        %v415 = vpop.f32.mrf.mxu0
        %v416 = vadd.f32 %v215, %v415
        %v417 = vpop.f32.mrf.mxu0
        %v418 = vpop.f32.mrf.mxu0
        %v419 = vadd.f32 %v215, %v418
        %v420 = vpop.f32.mrf.mxu0
        %421 = vmatprep.mubr.bf16.mxu0 0
        %422 = vmatmul.mubr.bf16.gmra.mxu0 %v323
        %v423 = vpop.f32.mrf.mxu0
        %v424 = vadd.f32 %v215, %v423
        %v425 = vpop.f32.mrf.mxu0
        %v426 = vpop.f32.mrf.mxu0
        %v427 = vadd.f32 %v215, %v426
        %v428 = vpop.f32.mrf.mxu0
        %429 = vmatprep.mubr.bf16.mxu0 0
        %430 = vmatmul.mubr.bf16.gmra.mxu0 %v326
        %v431 = vpop.f32.mrf.mxu0
        %v432 = vadd.f32 %v215, %v431
        %v433 = vpop.f32.mrf.mxu0
        %v434 = vpop.f32.mrf.mxu0
        %v435 = vadd.f32 %v215, %v434
        %v436 = vpop.f32.mrf.mxu0
        %437 = vmatprep.mubr.bf16.mxu0 0
        %438 = vmatmul.mubr.bf16.gmra.mxu0 %v329
        %v439 = vpop.f32.mrf.mxu0
        %v440 = vadd.f32 %v215, %v439
        %v441 = vpop.f32.mrf.mxu0
        %v442 = vpop.f32.mrf.mxu0
        %v443 = vadd.f32 %v215, %v442
        %v444 = vpop.f32.mrf.mxu0
        %445 = vmatprep.mubr.bf16.mxu0 0
        %446 = vmatmul.mubr.bf16.gmra.mxu0 %v332
        %v447 = vpop.f32.mrf.mxu0
        %v448 = vadd.f32 %v215, %v447
        %v449 = vpop.f32.mrf.mxu0
        %v450 = vpop.f32.mrf.mxu0
        %v451 = vadd.f32 %v215, %v450
        %v452 = vpop.f32.mrf.mxu0
        %453 = vmatprep.mubr.bf16.mxu0 0
        %454 = vmatmul.mubr.bf16.gmra.mxu0 %v335
        %v455 = vpop.f32.mrf.mxu0
        %v456 = vadd.f32 %v215, %v455
        %v457 = vpop.f32.mrf.mxu0
        %v458 = vpop.f32.mrf.mxu0
        %v459 = vadd.f32 %v215, %v458
        %v460 = vpop.f32.mrf.mxu0
        %461 = vmatprep.mubr.bf16.mxu0 0
        %462 = vmatmul.mubr.bf16.gmra.mxu0 %v338
        %v463 = vpop.f32.mrf.mxu0
        %v464 = vadd.f32 %v215, %v463
        %v465 = vpop.f32.mrf.mxu0
        %v466 = vpop.f32.mrf.mxu0
        %v467 = vadd.f32 %v215, %v466
        %v468 = vpop.f32.mrf.mxu0
        %469 = vmatprep.mubr.bf16.mxu0 0
        %470 = vmatmul.mubr.bf16.gmra.mxu0 %v341
        %v471 = vpop.f32.mrf.mxu0
        %v472 = vadd.f32 %v215, %v471
        %v473 = vpop.f32.mrf.mxu0
        %v474 = vpop.f32.mrf.mxu0
        %v475 = vadd.f32 %v215, %v474
        %v476 = vpop.f32.mrf.mxu0
        %477 = vmatprep.mubr.bf16.mxu0 0
        %478 = vmatmul.mubr.bf16.gmra.mxu0 %v344
        %v479 = vpop.f32.mrf.mxu0
        %v480 = vadd.f32 %v215, %v479
        %v481 = vpop.f32.mrf.mxu0
        %v482 = vpop.f32.mrf.mxu0
        %v483 = vadd.f32 %v215, %v482
        %v484 = vpop.f32.mrf.mxu0
        %485 = vmatprep.mubr.bf16.mxu0 0
        %486 = vmatmul.mubr.bf16.gmra.mxu0 %v347
        %v487 = vpop.f32.mrf.mxu0
        %v488 = vadd.f32 %v215, %v487
        %v489 = vpop.f32.mrf.mxu0
        %v490 = vpop.f32.mrf.mxu0
        %v491 = vadd.f32 %v215, %v490
        %v492 = vpop.f32.mrf.mxu0
        %493 = vmatprep.mubr.bf16.mxu0 0
        %494 = vmatmul.mubr.bf16.gmra.mxu0 %v350
        %v495 = vpop.f32.mrf.mxu0
        %v496 = vadd.f32 %v215, %v495
        %v497 = vpop.f32.mrf.mxu0
        %v498 = vpop.f32.mrf.mxu0
        %v499 = vadd.f32 %v215, %v498
        %v500 = vpop.f32.mrf.mxu0
        %501 = vmatprep.mubr.bf16.mxu0 0
        %502 = vmatmul.mubr.bf16.gmra.mxu0 %v353
        %v503 = vpop.f32.mrf.mxu0
        %v504 = vadd.f32 %v215, %v503
        %v505 = vpop.f32.mrf.mxu0
        %v506 = vpop.f32.mrf.mxu0
        %v507 = vadd.f32 %v215, %v506
        %v508 = vpop.f32.mrf.mxu0
        %509 = vmatprep.mubr.bf16.mxu0 0
        %510 = vmatmul.mubr.bf16.gmra.mxu0 %v356
        %v511 = vpop.f32.mrf.mxu0
        %v512 = vadd.f32 %v215, %v511
        %v513 = vpop.f32.mrf.mxu0
        %v514 = vpop.f32.mrf.mxu0
        %v515 = vadd.f32 %v215, %v514
        %v516 = vpop.f32.mrf.mxu0
        %517 = vmatprep.mubr.bf16.mxu0 0
        %518 = vmatmul.mubr.bf16.gmra.mxu0 %v359
        %v519 = vpop.f32.mrf.mxu0
        %v520 = vadd.f32 %v215, %v519
        %v521 = vpop.f32.mrf.mxu0
        %v522 = vpop.f32.mrf.mxu0
        %v523 = vadd.f32 %v215, %v522
        %v524 = vpop.f32.mrf.mxu0
        %525 = vdwg.mxu0
        %vm526 = vcmask 261120
        %527 = vst.msk [vmem:[%s164] sm:$0xff] %vm526, %v400
        %528 = vst.msk [vmem:[%s164 + $0x8] sm:$0xff] %vm526, %v403
        %529 = vst.msk [vmem:[%s164 + $0x10] sm:$0xff] %vm526, %v408
        %530 = vst.msk [vmem:[%s164 + $0x18] sm:$0xff] %vm526, %v411
        %531 = vst.msk [vmem:[%s164 + $0x20] sm:$0xff] %vm526, %v416
        %532 = vst.msk [vmem:[%s164 + $0x28] sm:$0xff] %vm526, %v419
        %533 = vst.msk [vmem:[%s164 + $0x30] sm:$0xff] %vm526, %v424
        %534 = vst.msk [vmem:[%s164 + $0x38] sm:$0xff] %vm526, %v427
        %535 = vst.msk [vmem:[%s164 + $0x40] sm:$0xff] %vm526, %v432
        %536 = vst.msk [vmem:[%s164 + $0x48] sm:$0xff] %vm526, %v435
        %537 = vst.msk [vmem:[%s164 + $0x50] sm:$0xff] %vm526, %v440
        %538 = vst.msk [vmem:[%s164 + $0x58] sm:$0xff] %vm526, %v443
        %539 = vst.msk [vmem:[%s164 + $0x60] sm:$0xff] %vm526, %v448
        %540 = vst.msk [vmem:[%s164 + $0x68] sm:$0xff] %vm526, %v451
        %541 = vst.msk [vmem:[%s164 + $0x70] sm:$0xff] %vm526, %v456
        %542 = vst.msk [vmem:[%s164 + $0x78] sm:$0xff] %vm526, %v459
        %543 = vst.msk [vmem:[%s164 + $0x80] sm:$0xff] %vm526, %v464
        %544 = vst.msk [vmem:[%s164 + $0x88] sm:$0xff] %vm526, %v467
        %545 = vst.msk [vmem:[%s164 + $0x90] sm:$0xff] %vm526, %v472
        %546 = vst.msk [vmem:[%s164 + $0x98] sm:$0xff] %vm526, %v475
        %547 = vst.msk [vmem:[%s164 + $0xa0] sm:$0xff] %vm526, %v480
        %548 = vst.msk [vmem:[%s164 + $0xa8] sm:$0xff] %vm526, %v483
        %549 = vst.msk [vmem:[%s164 + $0xb0] sm:$0xff] %vm526, %v488
        %550 = vst.msk [vmem:[%s164 + $0xb8] sm:$0xff] %vm526, %v491
        %551 = vst.msk [vmem:[%s164 + $0xc0] sm:$0xff] %vm526, %v496
        %552 = vst.msk [vmem:[%s164 + $0xc8] sm:$0xff] %vm526, %v499
        %553 = vst.msk [vmem:[%s164 + $0xd0] sm:$0xff] %vm526, %v504
        %554 = vst.msk [vmem:[%s164 + $0xd8] sm:$0xff] %vm526, %v507
        %555 = vst.msk [vmem:[%s164 + $0xe0] sm:$0xff] %vm526, %v512
        %556 = vst.msk [vmem:[%s164 + $0xe8] sm:$0xff] %vm526, %v515
        %557 = vst.msk [vmem:[%s164 + $0xf0] sm:$0xff] %vm526, %v520
        %558 = vst.msk [vmem:[%s164 + $0xf8] sm:$0xff] %vm526, %v523
        %s559 = sand.u32 %s93, 1
        %s560 = scalar_lea.sflag [#allocation3], %s559
        %s561 = sand.u32 %s93, 1
        %s562 = smul.addr %s561, 256
        %s563 = scalar_lea.vmem [#allocation2], %s562
        // Predicated region
        $region33: #{input_block_forward.1} parent=31 // pred_check
          %p564 = pneg %p103
        $region34: #{input_block_forward.1} parent=31 // pred_check_branch
          %566 = sbr.rel (%p564) target = $region36
        $region35: #{input_block_forward.1} parent=31 // pred_region
          %s567 = smul.u32 32, %s17
          %s569 = ssub.s32 4096, 4096
          %570 = vsyncadd %s560, %s569
          %s571 = smul.addr %s567, 128
          %s572 = scalar_lea.hbm %s3, %s571
          %s573 = sshll.u32 %s563, 4
          %s574 = int_to_ptr.vmem [resolvable:$true] %s573
          %579 = dma.vmem_to_hbm [thread:$0]  %s574, 4096, %s572, %s560, 128, 128, 8
        $region36: #{input_block_forward.1} parent=31 // pred_fallthru
          _
      $region32: #{input_block_forward.1} parent=5 // pred_fallthru
        _
      %p580 = scmp.le.s32.totalorder 2, %s12
      // Predicated region
      $region37: #{input_block_forward.1} parent=5 // pred_check
        %p581 = pneg %p580
      $region38: #{input_block_forward.1} parent=5 // pred_check_branch
        %583 = sbr.rel (%p581) target = $region40
      $region39: #{input_block_forward.1} parent=5 // pred_region
        %s584 = ssub.s32 %s12, 2
        // Predicated region
        $region41: #{input_block_forward.1} parent=39 // pred_check
          %p585 = pneg %p109
        $region42: #{input_block_forward.1} parent=39 // pred_check_branch
          %587 = sbr.rel (%p585) target = $region44
        $region43: #{input_block_forward.1} parent=39 // pred_region
          %s588 = sand.u32 %s94, 1
          %s589 = scalar_lea.sflag [#allocation3], %s588
          %s590 = sand.u32 %s94, 1
          %s591 = smul.addr %s590, 256
          %s592 = scalar_lea.vmem [#allocation2], %s591
          %593 = dma.done %s589, 4096
        $region44: #{input_block_forward.1} parent=39 // pred_fallthru
          _
      $region40: #{input_block_forward.1} parent=5 // pred_fallthru
        _
    $region6: #{input_block_forward.1} parent=1 // loop_footer
      %s16 = sadd.s32 1, %s12
    $region7: #{input_block_forward.1} parent=1 // loop_footer_branch
      %11 = sbr.rel target = $region3
    $region8: #{input_block_forward.1} parent=1 // loop_exit
      _
    %594 = vsyncpa [#allocation3], 1
    %s595 = scalar_lea.sflag [#allocation3], 1
    %596 = vsyncpa %s595, 1

</llo_original>
